<compile_context>
chip_gen: v7x
topology: tpu7x:2x2x1
jax: 0.10.0
libtpu: 0.0.40
codegen_flags: <defaults>
</compile_context>

<pallas_src>
import jax
import jax.numpy as jnp
from jax.experimental import pallas as pl
from jax.experimental.pallas import tpu as pltpu

_SUB = 8     # sublanes per vreg
_LANE = 128  # lanes per vreg


def _custom_loss_kernel(label_ref, output_ref, mask_ref, err_ref, nz_ref):
    s = pl.program_id(1)

    # Zero the per-batch accumulators (the resident output blocks) on the
    # first spatial step of each batch.
    @pl.when(s == 0)
    def _():
        err_ref[...] = jnp.zeros_like(err_ref)
        nz_ref[...] = jnp.zeros_like(nz_ref)

    lbl = label_ref[0]   # (TR, C) BCE input (prediction)
    tgt = output_ref[0]  # (TR, C) BCE target
    msk = mask_ref[0]    # (TR, C) BCE weight

    # binary_cross_entropy, reduction='none' (PyTorch clamps logs at -100),
    # fused form: -(t*log_p + (1-t)*log_1mp) == -(log_1mp + t*(log_p - log_1mp))
    log_p = jnp.maximum(jnp.log(lbl), -100.0)
    log_1mp = jnp.maximum(jnp.log(1.0 - lbl), -100.0)
    bce = -msk * (log_1mp + tgt * (log_p - log_1mp))
    nzv = (msk != 0.0).astype(jnp.float32)

    tr, c = bce.shape  # static

    # Fold sublane-row groups: (TR, C) -> (8, C).  Static, vreg-aligned slices
    # of a value => pure vreg-to-vreg VPU adds (no cross-lane movement).
    e = bce[0:_SUB, :]
    z = nzv[0:_SUB, :]
    for i in range(1, tr // _SUB):
        e = e + bce[i * _SUB:(i + 1) * _SUB, :]
        z = z + nzv[i * _SUB:(i + 1) * _SUB, :]

    # Fold lane-tile groups: (8, C) -> (8, 128).  Still pure VPU adds.
    e128 = e[:, 0:_LANE]
    z128 = z[:, 0:_LANE]
    for j in range(1, c // _LANE):
        e128 = e128 + e[:, j * _LANE:(j + 1) * _LANE]
        z128 = z128 + z[:, j * _LANE:(j + 1) * _LANE]

    # Accumulate into the per-batch (1, 8, 128) output blocks.
    err_ref[0] += e128
    nz_ref[0] += z128


def _round_up(x, m):
    return ((x + m - 1) // m) * m


def custom_loss(label, output, mask):
    """label, output, mask: (B, H, W) arrays. Returns scalar float32 loss."""
    B, H, W = label.shape
    S = H * W

    # Lane-dense spatial tiling: last dim C (multiple of 128, <= 2048),
    # tile rows TR (multiple of 8, <= 256) -> per-input tile <= 2 MiB f32.
    C = min(2048, _round_up(S, _LANE))
    r_raw = pl.cdiv(S, C)
    TR = min(256, _round_up(r_raw, _SUB))
    R = _round_up(r_raw, TR)
    S_pad = R * C

    def prep(x, pad_value):
        x = x.reshape(B, S).astype(jnp.float32)
        if S_pad != S:
            # Pad so padded elements contribute exactly 0 to both the BCE sum
            # (mask pads with 0) and the nonzero count; label pads with 0.5 so
            # its logs stay finite.
            x = jnp.pad(x, ((0, 0), (0, S_pad - S)), constant_values=pad_value)
        return x.reshape(B, R, C)

    lbl = prep(label, 0.5)
    tgt = prep(output, 0.0)
    msk = prep(mask, 0.0)

    grid = (B, R // TR)
    in_spec = pl.BlockSpec((1, TR, C), lambda b, s: (b, s, 0))
    out_spec = pl.BlockSpec((1, _SUB, _LANE), lambda b, s: (b, 0, 0))

    err_part, nz_part = pl.pallas_call(
        _custom_loss_kernel,
        out_shape=(
            jax.ShapeDtypeStruct((B, _SUB, _LANE), jnp.float32),
            jax.ShapeDtypeStruct((B, _SUB, _LANE), jnp.float32),
        ),
        grid_spec=pltpu.PrefetchScalarGridSpec(
            num_scalar_prefetch=0,
            grid=grid,
            in_specs=[in_spec, in_spec, in_spec],
            out_specs=[out_spec, out_spec],
        ),
        compiler_params=pltpu.CompilerParams(
            # batch axis is independent (sharded across v7x's 2 TCs);
            # the spatial axis is the accumulation/reduction axis.
            dimension_semantics=("parallel", "arbitrary"),
            vmem_limit_bytes=32 * 1024 * 1024,
        ),
    )(lbl, tgt, msk)

    # Final cross-lane reductions, divide and batch mean in plain JAX.
    err_b = jnp.sum(err_part, axis=(1, 2))
    nz_b = jnp.sum(nz_part, axis=(1, 2))
    return jnp.mean(err_b / nz_b)


def _reference_loss(label, output, mask):
    log_p = jnp.maximum(jnp.log(label), -100.0)
    log_1mp = jnp.maximum(jnp.log(1.0 - label), -100.0)
    bce = -(output * log_p + (1.0 - output) * log_1mp) * mask
    err = jnp.sum(bce, axis=(1, 2))
    nz = jnp.sum((mask != 0.0).astype(jnp.float32), axis=(1, 2))
    return jnp.mean(err / nz)


if __name__ == "__main__":
    key = jax.random.PRNGKey(0)
    k1, k2, k3 = jax.random.split(key, 3)

    B, H, W = 2, 16, 16
    # Predictions strictly inside (0, 1) to keep logs finite.
    label = jax.random.uniform(k1, (B, H, W), jnp.float32, 0.01, 0.99)
    # Targets in [0, 1].
    output = jax.random.uniform(k2, (B, H, W), jnp.float32, 0.0, 1.0)
    # Binary mask with some zeros (nonzero count per batch is > 0 w.h.p.).
    mask = (jax.random.uniform(k3, (B, H, W), jnp.float32) > 0.3).astype(jnp.float32)

    loss = custom_loss(label, output, mask)
    jax.block_until_ready(loss)

    ref = _reference_loss(label, output, mask)
    assert jnp.allclose(loss, ref, rtol=1e-5, atol=1e-5), (loss, ref)

    print("KERNEL_OK")
</pallas_src>

<mosaic_0001>
module attributes {stable_mosaic.version = 11 : i64} {
  func.func @_custom_loss_kernel(%arg0: i32, %arg1: i32, %arg2: memref<1x8x256xf32, #tpu.memory_space<vmem>>, %arg3: memref<1x8x256xf32, #tpu.memory_space<vmem>>, %arg4: memref<1x8x256xf32, #tpu.memory_space<vmem>>, %arg5: memref<1x8x128xf32, #tpu.memory_space<vmem>>, %arg6: memref<1x8x128xf32, #tpu.memory_space<vmem>>) attributes {dimension_semantics = [#tpu.dimension_semantics<parallel>, #tpu.dimension_semantics<arbitrary>], iteration_bounds = array<i64: 2, 1>, scalar_prefetch = 0 : i64, scratch_operands = 0 : i64, tpu.core_type = #tpu.core_type<tc>, window_params = [{transform_indices = @transform_0, window_bounds = array<i64: 1, 8, 256>}, {transform_indices = @transform_1, window_bounds = array<i64: 1, 8, 256>}, {transform_indices = @transform_2, window_bounds = array<i64: 1, 8, 256>}, {transform_indices = @transform_3, window_bounds = array<i64: 1, 8, 128>}, {transform_indices = @transform_4, window_bounds = array<i64: 1, 8, 128>}]} {
    %c0_i32 = arith.constant 0 : i32
    %0 = arith.cmpi eq, %arg1, %c0_i32 : i32
    %1 = arith.extui %0 : i1 to i32
    %c0_i32_0 = arith.constant 0 : i32
    %2 = arith.cmpi ne, %1, %c0_i32_0 : i32
    scf.if %2 {
      %cst_25 = arith.constant 0.000000e+00 : f32
      %45 = vector.broadcast %cst_25 : f32 to vector<1x8x128xf32>
      %c0_26 = arith.constant 0 : index
      %c0_27 = arith.constant 0 : index
      %c0_28 = arith.constant 0 : index
      %46 = vector.load %arg5[%c0_26, %c0_27, %c0_28] : memref<1x8x128xf32, #tpu.memory_space<vmem>>, vector<1x8x128xf32>
      tpu.vector_store %arg5[%c0_26, %c0_27, %c0_28], %45 {strides = array<i32>} : memref<1x8x128xf32, #tpu.memory_space<vmem>>, vector<1x8x128xf32>,
      %cst_29 = arith.constant 0.000000e+00 : f32
      %47 = vector.broadcast %cst_29 : f32 to vector<1x8x128xf32>
      %c0_30 = arith.constant 0 : index
      %c0_31 = arith.constant 0 : index
      %c0_32 = arith.constant 0 : index
      %48 = vector.load %arg6[%c0_30, %c0_31, %c0_32] : memref<1x8x128xf32, #tpu.memory_space<vmem>>, vector<1x8x128xf32>
      tpu.vector_store %arg6[%c0_30, %c0_31, %c0_32], %47 {strides = array<i32>} : memref<1x8x128xf32, #tpu.memory_space<vmem>>, vector<1x8x128xf32>,
    } else {
    }
    %c0 = arith.constant 0 : index
    %c0_1 = arith.constant 0 : index
    %c0_2 = arith.constant 0 : index
    %3 = vector.load %arg2[%c0, %c0_1, %c0_2] : memref<1x8x256xf32, #tpu.memory_space<vmem>>, vector<1x8x256xf32>
    %4 = vector.shape_cast %3 : vector<1x8x256xf32> to vector<8x256xf32>
    %c0_3 = arith.constant 0 : index
    %c0_4 = arith.constant 0 : index
    %c0_5 = arith.constant 0 : index
    %5 = vector.load %arg3[%c0_3, %c0_4, %c0_5] : memref<1x8x256xf32, #tpu.memory_space<vmem>>, vector<1x8x256xf32>
    %6 = vector.shape_cast %5 : vector<1x8x256xf32> to vector<8x256xf32>
    %c0_6 = arith.constant 0 : index
    %c0_7 = arith.constant 0 : index
    %c0_8 = arith.constant 0 : index
    %7 = vector.load %arg4[%c0_6, %c0_7, %c0_8] : memref<1x8x256xf32, #tpu.memory_space<vmem>>, vector<1x8x256xf32>
    %8 = vector.shape_cast %7 : vector<1x8x256xf32> to vector<8x256xf32>
    %9 = math.log %4 : vector<8x256xf32>
    %cst = arith.constant -1.000000e+02 : f32
    %10 = vector.broadcast %cst : f32 to vector<8x256xf32>
    %11 = arith.maximumf %9, %10 : vector<8x256xf32>
    %cst_9 = arith.constant 1.000000e+00 : f32
    %12 = vector.broadcast %cst_9 : f32 to vector<8x256xf32>
    %13 = arith.subf %12, %4 : vector<8x256xf32>
    %14 = math.log %13 : vector<8x256xf32>
    %cst_10 = arith.constant -1.000000e+02 : f32
    %15 = vector.broadcast %cst_10 : f32 to vector<8x256xf32>
    %16 = arith.maximumf %14, %15 : vector<8x256xf32>
    %cst_11 = arith.constant 0.000000e+00 : f32
    %17 = vector.broadcast %cst_11 : f32 to vector<8x256xf32>
    %18 = arith.subf %17, %8 : vector<8x256xf32>
    %19 = arith.subf %11, %16 : vector<8x256xf32>
    %20 = arith.mulf %6, %19 : vector<8x256xf32>
    %21 = arith.addf %16, %20 : vector<8x256xf32>
    %22 = arith.mulf %18, %21 : vector<8x256xf32>
    %cst_12 = arith.constant 0.000000e+00 : f32
    %23 = vector.broadcast %cst_12 : f32 to vector<8x256xf32>
    %24 = arith.cmpf one, %8, %23 : vector<8x256xf32>
    %25 = arith.extui %24 : vector<8x256xi1> to vector<8x256xi32>
    %26 = arith.sitofp %25 : vector<8x256xi32> to vector<8x256xf32>
    %27 = vector.extract_strided_slice %22 {offsets = [0, 0], sizes = [8, 128], strides = [1, 1]} : vector<8x256xf32> to vector<8x128xf32>
    %28 = vector.extract_strided_slice %26 {offsets = [0, 0], sizes = [8, 128], strides = [1, 1]} : vector<8x256xf32> to vector<8x128xf32>
    %29 = vector.extract_strided_slice %22 {offsets = [0, 128], sizes = [8, 128], strides = [1, 1]} : vector<8x256xf32> to vector<8x128xf32>
    %30 = arith.addf %27, %29 : vector<8x128xf32>
    %31 = vector.extract_strided_slice %26 {offsets = [0, 128], sizes = [8, 128], strides = [1, 1]} : vector<8x256xf32> to vector<8x128xf32>
    %32 = arith.addf %28, %31 : vector<8x128xf32>
    %c0_13 = arith.constant 0 : index
    %c0_14 = arith.constant 0 : index
    %c0_15 = arith.constant 0 : index
    %33 = vector.load %arg5[%c0_13, %c0_14, %c0_15] : memref<1x8x128xf32, #tpu.memory_space<vmem>>, vector<1x8x128xf32>
    %34 = vector.shape_cast %33 : vector<1x8x128xf32> to vector<8x128xf32>
    %35 = arith.addf %34, %30 : vector<8x128xf32>
    %c0_16 = arith.constant 0 : index
    %c0_17 = arith.constant 0 : index
    %c0_18 = arith.constant 0 : index
    %36 = vector.load %arg5[%c0_16, %c0_17, %c0_18] : memref<1x8x128xf32, #tpu.memory_space<vmem>>, vector<1x8x128xf32>
    %37 = vector.shape_cast %36 : vector<1x8x128xf32> to vector<8x128xf32>
    %38 = vector.shape_cast %35 : vector<8x128xf32> to vector<1x8x128xf32>
    tpu.vector_store %arg5[%c0_16, %c0_17, %c0_18], %38 {strides = array<i32>} : memref<1x8x128xf32, #tpu.memory_space<vmem>>, vector<1x8x128xf32>,
    %c0_19 = arith.constant 0 : index
    %c0_20 = arith.constant 0 : index
    %c0_21 = arith.constant 0 : index
    %39 = vector.load %arg6[%c0_19, %c0_20, %c0_21] : memref<1x8x128xf32, #tpu.memory_space<vmem>>, vector<1x8x128xf32>
    %40 = vector.shape_cast %39 : vector<1x8x128xf32> to vector<8x128xf32>
    %41 = arith.addf %40, %32 : vector<8x128xf32>
    %c0_22 = arith.constant 0 : index
    %c0_23 = arith.constant 0 : index
    %c0_24 = arith.constant 0 : index
    %42 = vector.load %arg6[%c0_22, %c0_23, %c0_24] : memref<1x8x128xf32, #tpu.memory_space<vmem>>, vector<1x8x128xf32>
    %43 = vector.shape_cast %42 : vector<1x8x128xf32> to vector<8x128xf32>
    %44 = vector.shape_cast %41 : vector<8x128xf32> to vector<1x8x128xf32>
    tpu.vector_store %arg6[%c0_22, %c0_23, %c0_24], %44 {strides = array<i32>} : memref<1x8x128xf32, #tpu.memory_space<vmem>>, vector<1x8x128xf32>,
    return
  }
  func.func @transform_0(%arg0: i32, %arg1: i32) -> (i32, i32, i32) {
    %c0_i32 = arith.constant 0 : i32
    %c0_i32_0 = arith.constant 0 : i32
    return %arg0, %arg1, %c0_i32 : i32, i32, i32
  }
  func.func @transform_1(%arg0: i32, %arg1: i32) -> (i32, i32, i32) {
    %c0_i32 = arith.constant 0 : i32
    %c0_i32_0 = arith.constant 0 : i32
    return %arg0, %arg1, %c0_i32 : i32, i32, i32
  }
  func.func @transform_2(%arg0: i32, %arg1: i32) -> (i32, i32, i32) {
    %c0_i32 = arith.constant 0 : i32
    %c0_i32_0 = arith.constant 0 : i32
    return %arg0, %arg1, %c0_i32 : i32, i32, i32
  }
  func.func @transform_3(%arg0: i32, %arg1: i32) -> (i32, i32, i32) {
    %c0_i32 = arith.constant 0 : i32
    %c0_i32_0 = arith.constant 0 : i32
    %c0_i32_1 = arith.constant 0 : i32
    return %arg0, %c0_i32, %c0_i32_0 : i32, i32, i32
  }
  func.func @transform_4(%arg0: i32, %arg1: i32) -> (i32, i32, i32) {
    %c0_i32 = arith.constant 0 : i32
    %c0_i32_0 = arith.constant 0 : i32
    %c0_i32_1 = arith.constant 0 : i32
    return %arg0, %c0_i32, %c0_i32_0 : i32, i32, i32
  }
}

</mosaic_0001>

<llo_original>
// kernel: tpu_custom_call.1
$region0: #{tpu_custom_call.1}
  #allocation0 [shape = 'u32[]', space=smem, size = 0x4, offset = 0x4, fixed_abs, tag = 'smem constant byte address 0x4 - core index']
  #allocation1 [shape = 'u32[144,128]{1,0:T(1,128)}', space=vmem, size = 0x12000, scoped, tag = 'internal scratch']
  %s0 = inlined_call_operand.hbm [shape: f32[2,8,256], index: 0, kind: input, shape index: {}]
  %s1 = inlined_call_operand.hbm [shape: f32[2,8,256], index: 1, kind: input, shape index: {}]
  %s2 = inlined_call_operand.hbm [shape: f32[2,8,256], index: 2, kind: input, shape index: {}]
  %s3 = inlined_call_operand.hbm [shape: f32[2,8,128], index: 3, kind: output, shape index: {0}]
  %s4 = inlined_call_operand.hbm [shape: f32[2,8,128], index: 4, kind: output, shape index: {1}]
  %5 = xla_tuple %s3, %s4
  %s6 = sld [smem:[#allocation0]]
  $region69: #{tpu_custom_call.1} parent=0
    _
  %s8 = ssub.s32 1, %s6
  %s9 = scalar_select 0, %s8, %s6
  $region1: #{tpu_custom_call.1} parent=0
    #allocation2 [shape = 'u8[16384]{0}', space=vmem, size = 0x4000, scoped, tag = 'input window, operand 0']
    #allocation3 [shape = 's32[2]{0}', space=sflag, size = 0x8, scoped, tag = 'scoped memory for tpu_custom_call.1']
    #allocation4 [shape = 's32[2]{0}', space=sflag, size = 0x8, scoped, tag = 'scoped memory for tpu_custom_call.1']
    #allocation5 [shape = 'u8[16384]{0}', space=vmem, size = 0x4000, scoped, tag = 'input window, operand 1']
    #allocation6 [shape = 's32[2]{0}', space=sflag, size = 0x8, scoped, tag = 'scoped memory for tpu_custom_call.1']
    #allocation7 [shape = 'u8[16384]{0}', space=vmem, size = 0x4000, scoped, tag = 'input window, operand 2']
    #allocation8 [shape = 'u8[8192]{0}', space=vmem, size = 0x2000, scoped, tag = 'output window, operand 0']
    #allocation9 [shape = 'u8[8192]{0}', space=vmem, size = 0x2000, scoped, tag = 'output window, operand 1']
    #allocation10 [shape = 's32[2]{0}', space=sflag, size = 0x8, scoped, tag = 'scoped memory for tpu_custom_call.1']
    %10 = vsyncpa [#allocation3], 0
    %s11 = scalar_lea.sflag [#allocation3], 1
    %12 = vsyncpa %s11, 0
    %13 = vsyncpa [#allocation6], 0
    %s14 = scalar_lea.sflag [#allocation6], 1
    %15 = vsyncpa %s14, 0
    %16 = vsyncpa [#allocation4], 0
    %s17 = scalar_lea.sflag [#allocation4], 1
    %18 = vsyncpa %s17, 0
    %19 = vsyncpa [#allocation10], 0
    %s20 = scalar_lea.sflag [#allocation10], 1
    %21 = vsyncpa %s20, 0
    loop: start=0, step=1, limit=4
    $region2: #{tpu_custom_call.1} parent=1 // loop_pre_header
      _
    $region3: #{tpu_custom_call.1} parent=1 // loop_header
      %s23 = sphi 0, %s27
      %p24 = scmp.ge.s32.totalorder %s23, 4
      %s30 = sphi 0, %s42
      %s31 = sphi 0, %s38
      %s32 = sphi 0, %s30
      %s33 = sphi 0, %s31
      %s34 = sphi 0, %s32
      %s35 = sphi 0, %s33
      %s47 = sphi 0, %s49
      %s50 = sphi 0, %s47
      %s51 = sphi 0, %s50
      %s67 = sphi 0, %s51
      %s75 = sphi 0, %s77
      %s78 = sphi 0, %s75
      %s79 = sphi 0, %s78
      %s95 = sphi 0, %s79
      %s103 = sphi 0, %s105
      %s106 = sphi 0, %s103
      %s107 = sphi 0, %s106
      %s123 = sphi 0, %s107
      %s129 = sphi 0, %s131
      %s132 = sphi 0, %s129
      %s133 = sphi 0, %s132
      %s149 = sphi 0, %s133
      %s155 = sphi 0, %s157
      %s158 = sphi 0, %s155
      %s159 = sphi 0, %s158
      %s175 = sphi 0, %s159
    $region4: #{tpu_custom_call.1} parent=1 // loop_header_branch
      %26 = sbr.rel (%p24) target = $region8
    $region5: #{tpu_custom_call.1} parent=1 // loop_body
      %s28 = ssub.s32 %s23, 1
      %s29 = ssub.s32 %s23, 2
      %s36 = sadd.s32 1, %s31
      %p37 = scmp.ge.s32.totalorder %s36, 1
      %s38 = scalar_select %p37, 0, %s36
      %s39 = sadd.s32 1, %s30
      %s40 = scalar_select %p37, %s39, %s30
      %p41 = scmp.ge.s32.totalorder %s40, 2
      %s42 = scalar_select %p41, 0, %s40
      %s43 = ssub.s32 %s30, %s42
      %s44 = ssub.s32 %s31, %s38
      %s45 = sor.u32 %s43, %s44
      %p46 = scmp.eq.s32.totalorder %s45, 0
      %s48 = sadd.s32 %s47, 1
      %s49 = scalar_select %p46, %s47, %s48
      %p52 = pneg %p46
      %p53 = scmp.eq.s32.totalorder %s23, 1
      %p54 = por %p52, %p53
      %p55 = scmp.ne.s32.totalorder %s47, %s50
      %p56 = scmp.eq.s32.totalorder %s23, 0
      %p57 = por %p55, %p56
      %p58 = scmp.ne.s32.totalorder %s47, %s50
      %p59 = scmp.eq.s32.totalorder %s28, 1
      %p60 = por %p58, %p59
      %p61 = scmp.ne.s32.totalorder %s50, %s51
      %p62 = scmp.eq.s32.totalorder %s28, 0
      %p63 = por %p61, %p62
      %p64 = scmp.ne.s32.totalorder %s50, %s51
      %p65 = scmp.eq.s32.totalorder %s29, 1
      %p66 = por %p64, %p65
      %p68 = scmp.ne.s32.totalorder %s51, %s67
      %p69 = scmp.eq.s32.totalorder %s29, 0
      %p70 = por %p68, %p69
      %s71 = ssub.s32 %s30, %s42
      %s72 = ssub.s32 %s31, %s38
      %s73 = sor.u32 %s71, %s72
      %p74 = scmp.eq.s32.totalorder %s73, 0
      %s76 = sadd.s32 %s75, 1
      %s77 = scalar_select %p74, %s75, %s76
      %p80 = pneg %p74
      %p81 = scmp.eq.s32.totalorder %s23, 1
      %p82 = por %p80, %p81
      %p83 = scmp.ne.s32.totalorder %s75, %s78
      %p84 = scmp.eq.s32.totalorder %s23, 0
      %p85 = por %p83, %p84
      %p86 = scmp.ne.s32.totalorder %s75, %s78
      %p87 = scmp.eq.s32.totalorder %s28, 1
      %p88 = por %p86, %p87
      %p89 = scmp.ne.s32.totalorder %s78, %s79
      %p90 = scmp.eq.s32.totalorder %s28, 0
      %p91 = por %p89, %p90
      %p92 = scmp.ne.s32.totalorder %s78, %s79
      %p93 = scmp.eq.s32.totalorder %s29, 1
      %p94 = por %p92, %p93
      %p96 = scmp.ne.s32.totalorder %s79, %s95
      %p97 = scmp.eq.s32.totalorder %s29, 0
      %p98 = por %p96, %p97
      %s99 = ssub.s32 %s30, %s42
      %s100 = ssub.s32 %s31, %s38
      %s101 = sor.u32 %s99, %s100
      %p102 = scmp.eq.s32.totalorder %s101, 0
      %s104 = sadd.s32 %s103, 1
      %s105 = scalar_select %p102, %s103, %s104
      %p108 = pneg %p102
      %p109 = scmp.eq.s32.totalorder %s23, 1
      %p110 = por %p108, %p109
      %p111 = scmp.ne.s32.totalorder %s103, %s106
      %p112 = scmp.eq.s32.totalorder %s23, 0
      %p113 = por %p111, %p112
      %p114 = scmp.ne.s32.totalorder %s103, %s106
      %p115 = scmp.eq.s32.totalorder %s28, 1
      %p116 = por %p114, %p115
      %p117 = scmp.ne.s32.totalorder %s106, %s107
      %p118 = scmp.eq.s32.totalorder %s28, 0
      %p119 = por %p117, %p118
      %p120 = scmp.ne.s32.totalorder %s106, %s107
      %p121 = scmp.eq.s32.totalorder %s29, 1
      %p122 = por %p120, %p121
      %p124 = scmp.ne.s32.totalorder %s107, %s123
      %p125 = scmp.eq.s32.totalorder %s29, 0
      %p126 = por %p124, %p125
      %s127 = ssub.s32 %s30, %s42
      %p128 = scmp.eq.s32.totalorder %s127, 0
      %s130 = sadd.s32 %s129, 1
      %s131 = scalar_select %p128, %s129, %s130
      %p134 = pneg %p128
      %p135 = scmp.eq.s32.totalorder %s23, 1
      %p136 = por %p134, %p135
      %p137 = scmp.ne.s32.totalorder %s129, %s132
      %p138 = scmp.eq.s32.totalorder %s23, 0
      %p139 = por %p137, %p138
      %p140 = scmp.ne.s32.totalorder %s129, %s132
      %p141 = scmp.eq.s32.totalorder %s28, 1
      %p142 = por %p140, %p141
      %p143 = scmp.ne.s32.totalorder %s132, %s133
      %p144 = scmp.eq.s32.totalorder %s28, 0
      %p145 = por %p143, %p144
      %p146 = scmp.ne.s32.totalorder %s132, %s133
      %p147 = scmp.eq.s32.totalorder %s29, 1
      %p148 = por %p146, %p147
      %p150 = scmp.ne.s32.totalorder %s133, %s149
      %p151 = scmp.eq.s32.totalorder %s29, 0
      %p152 = por %p150, %p151
      %s153 = ssub.s32 %s30, %s42
      %p154 = scmp.eq.s32.totalorder %s153, 0
      %s156 = sadd.s32 %s155, 1
      %s157 = scalar_select %p154, %s155, %s156
      %p160 = pneg %p154
      %p161 = scmp.eq.s32.totalorder %s23, 1
      %p162 = por %p160, %p161
      %p163 = scmp.ne.s32.totalorder %s155, %s158
      %p164 = scmp.eq.s32.totalorder %s23, 0
      %p165 = por %p163, %p164
      %p166 = scmp.ne.s32.totalorder %s155, %s158
      %p167 = scmp.eq.s32.totalorder %s28, 1
      %p168 = por %p166, %p167
      %p169 = scmp.ne.s32.totalorder %s158, %s159
      %p170 = scmp.eq.s32.totalorder %s28, 0
      %p171 = por %p169, %p170
      %p172 = scmp.ne.s32.totalorder %s158, %s159
      %p173 = scmp.eq.s32.totalorder %s29, 1
      %p174 = por %p172, %p173
      %p176 = scmp.ne.s32.totalorder %s159, %s175
      %p177 = scmp.eq.s32.totalorder %s29, 0
      %p178 = por %p176, %p177
      %p179 = scmp.le.s32.totalorder 1, %s23
      %p180 = scmp.lt.s32.totalorder %s23, 3
      %p181 = pnand %p179, %p180
      %p182 = pneg %p181
      // Predicated region
      $region9: #{tpu_custom_call.1} parent=5 // pred_check
        _
      $region10: #{tpu_custom_call.1} parent=5 // pred_check_branch
        %184 = sbr.rel (%p181) target = $region12
      $region11: #{tpu_custom_call.1} parent=5 // pred_region
        %s185 = ssub.s32 %s23, 1
      $region12: #{tpu_custom_call.1} parent=5 // pred_fallthru
        _
      %p186 = scmp.lt.s32.totalorder %s23, 2
      // Predicated region
      $region13: #{tpu_custom_call.1} parent=5 // pred_check
        %p187 = pneg %p186
      $region14: #{tpu_custom_call.1} parent=5 // pred_check_branch
        %189 = sbr.rel (%p187) target = $region16
      $region15: #{tpu_custom_call.1} parent=5 // pred_region
        // Predicated region
        $region17: #{tpu_custom_call.1} parent=15 // pred_check
          %p190 = pneg %p57
        $region18: #{tpu_custom_call.1} parent=15 // pred_check_branch
          %192 = sbr.rel (%p190) target = $region20
        $region19: #{tpu_custom_call.1} parent=15 // pred_region
          %s193 = sand.u32 %s47, 1
          %s194 = scalar_lea.sflag [#allocation3], %s193
          %s195 = sand.u32 %s47, 1
          %s196 = smul.addr %s195, 16
          %s197 = scalar_lea.vmem [#allocation2], %s196
          %s199 = ssub.s32 256, 256
          %200 = vsyncadd %s194, %s199
          %s201 = smul.addr %s31, 2
          %s202 = smul.addr %s30, 2
          %s203 = sadd.s32 %s201, %s202
          %s204 = smul.addr %s203, 128
          %s205 = scalar_lea.hbm %s0, %s204
          %s207 = sshll.u32 %s197, 4
          %s208 = int_to_ptr.vmem [resolvable:$true] %s207
          %210 = dma.hbm_to_vmem [thread:$0]  %s205, 256, %s208, %s194
        $region20: #{tpu_custom_call.1} parent=15 // pred_fallthru
          _
        // Predicated region
        $region21: #{tpu_custom_call.1} parent=15 // pred_check
          %p211 = pneg %p85
        $region22: #{tpu_custom_call.1} parent=15 // pred_check_branch
          %213 = sbr.rel (%p211) target = $region24
        $region23: #{tpu_custom_call.1} parent=15 // pred_region
          %s214 = sand.u32 %s23, 1
          %s215 = scalar_lea.sflag [#allocation6], %s214
          %s216 = sand.u32 %s75, 1
          %s217 = smul.addr %s216, 16
          %s218 = scalar_lea.vmem [#allocation5], %s217
          %s220 = ssub.s32 256, 256
          %221 = vsyncadd %s215, %s220
          %s222 = smul.addr %s31, 2
          %s223 = smul.addr %s30, 2
          %s224 = sadd.s32 %s222, %s223
          %s225 = smul.addr %s224, 128
          %s226 = scalar_lea.hbm %s1, %s225
          %s228 = sshll.u32 %s218, 4
          %s229 = int_to_ptr.vmem [resolvable:$true] %s228
          %231 = dma.hbm_to_vmem [thread:$0]  %s226, 256, %s229, %s215
        $region24: #{tpu_custom_call.1} parent=15 // pred_fallthru
          _
        // Predicated region
        $region25: #{tpu_custom_call.1} parent=15 // pred_check
          %p232 = pneg %p113
        $region26: #{tpu_custom_call.1} parent=15 // pred_check_branch
          %234 = sbr.rel (%p232) target = $region28
        $region27: #{tpu_custom_call.1} parent=15 // pred_region
          %s235 = sand.u32 %s23, 1
          %s236 = scalar_lea.sflag [#allocation6], %s235
          %s237 = sand.u32 %s103, 1
          %s238 = smul.addr %s237, 16
          %s239 = scalar_lea.vmem [#allocation7], %s238
          %s241 = ssub.s32 256, 256
          %242 = vsyncadd %s236, %s241
          %s243 = smul.addr %s31, 2
          %s244 = smul.addr %s30, 2
          %s245 = sadd.s32 %s243, %s244
          %s246 = smul.addr %s245, 128
          %s247 = scalar_lea.hbm %s2, %s246
          %s249 = sshll.u32 %s239, 4
          %s250 = int_to_ptr.vmem [resolvable:$true] %s249
          %252 = dma.hbm_to_vmem [thread:$0]  %s247, 256, %s250, %s236
        $region28: #{tpu_custom_call.1} parent=15 // pred_fallthru
          _
      $region16: #{tpu_custom_call.1} parent=5 // pred_fallthru
        _
      %p253 = scmp.le.s32.totalorder 1, %s23
      %p254 = scmp.lt.s32.totalorder %s23, 3
      %p255 = pnand %p253, %p254
      %p256 = pneg %p255
      // Predicated region
      $region29: #{tpu_custom_call.1} parent=5 // pred_check
        _
      $region30: #{tpu_custom_call.1} parent=5 // pred_check_branch
        %258 = sbr.rel (%p255) target = $region32
      $region31: #{tpu_custom_call.1} parent=5 // pred_region
        %s259 = ssub.s32 %s23, 1
        %s260 = sand.u32 %s50, 1
        %s261 = scalar_lea.sflag [#allocation3], %s260
        %s262 = sand.u32 %s50, 1
        %s263 = smul.addr %s262, 16
        %s264 = scalar_lea.vmem [#allocation2], %s263
        // Predicated region
        $region33: #{tpu_custom_call.1} parent=31 // pred_check
          %p265 = pneg %p63
        $region34: #{tpu_custom_call.1} parent=31 // pred_check_branch
          %267 = sbr.rel (%p265) target = $region36
        $region35: #{tpu_custom_call.1} parent=31 // pred_region
          %268 = dma.done %s261, 256
        $region36: #{tpu_custom_call.1} parent=31 // pred_fallthru
          _
        %s269 = sand.u32 %s28, 1
        %s270 = scalar_lea.sflag [#allocation6], %s269
        %s271 = sand.u32 %s78, 1
        %s272 = smul.addr %s271, 16
        %s273 = scalar_lea.vmem [#allocation5], %s272
        // Predicated region
        $region37: #{tpu_custom_call.1} parent=31 // pred_check
          %p274 = pneg %p91
        $region38: #{tpu_custom_call.1} parent=31 // pred_check_branch
          %276 = sbr.rel (%p274) target = $region40
        $region39: #{tpu_custom_call.1} parent=31 // pred_region
          %277 = dma.done %s270, 256
        $region40: #{tpu_custom_call.1} parent=31 // pred_fallthru
          _
        %s278 = sand.u32 %s28, 1
        %s279 = scalar_lea.sflag [#allocation6], %s278
        %s280 = sand.u32 %s106, 1
        %s281 = smul.addr %s280, 16
        %s282 = scalar_lea.vmem [#allocation7], %s281
        // Predicated region
        $region41: #{tpu_custom_call.1} parent=31 // pred_check
          %p283 = pneg %p119
        $region42: #{tpu_custom_call.1} parent=31 // pred_check_branch
          %285 = sbr.rel (%p283) target = $region44
        $region43: #{tpu_custom_call.1} parent=31 // pred_region
          %286 = dma.done %s279, 256
        $region44: #{tpu_custom_call.1} parent=31 // pred_fallthru
          _
        %s287 = sand.u32 %s50, 1
        %s288 = scalar_lea.sflag [#allocation3], %s287
        %s289 = sand.u32 %s50, 1
        %s290 = smul.addr %s289, 16
        %s291 = scalar_lea.vmem [#allocation2], %s290
        %p292 = pneg %p63
        %p293 = pneg %p60
        %s294 = sand.u32 %s28, 1
        %s295 = scalar_lea.sflag [#allocation6], %s294
        %s296 = sand.u32 %s78, 1
        %s297 = smul.addr %s296, 16
        %s298 = scalar_lea.vmem [#allocation5], %s297
        %p299 = pneg %p91
        %p300 = pneg %p88
        %s301 = sand.u32 %s28, 1
        %s302 = scalar_lea.sflag [#allocation6], %s301
        %s303 = sand.u32 %s106, 1
        %s304 = smul.addr %s303, 16
        %s305 = scalar_lea.vmem [#allocation7], %s304
        %p306 = pneg %p119
        %p307 = pneg %p116
        %p308 = pneg %p145
        %p309 = pneg %p142
        %s310 = sand.u32 %s132, 1
        %s311 = scalar_lea.sflag [#allocation4], %s310
        %s312 = sand.u32 %s132, 1
        %s313 = smul.addr %s312, 8
        %s314 = scalar_lea.vmem [#allocation8], %s313
        %p315 = pneg %p171
        %p316 = pneg %p168
        %s317 = sand.u32 %s158, 1
        %s318 = scalar_lea.sflag [#allocation10], %s317
        %s319 = sand.u32 %s158, 1
        %s320 = smul.addr %s319, 8
        %s321 = scalar_lea.vmem [#allocation9], %s320
        %p322 = scmp.eq.s32.totalorder %s33, 0
        // Predicated region
        $region45: #{tpu_custom_call.1} parent=31 // pred_check
          %p323 = pneg %p322
        $region46: #{tpu_custom_call.1} parent=31 // pred_check_branch
          %325 = sbr.rel (%p323) target = $region48
        $region47: #{tpu_custom_call.1} parent=31 // pred_region
          %326 = vst [vmem:[%s314] sm:$0xff] 0.0
          %327 = vst [vmem:[%s321] sm:$0xff] 0.0
        $region48: #{tpu_custom_call.1} parent=31 // pred_fallthru
          _
        %v328 = vld [vmem:[%s264] sm:$0xff]
        %v329 = vld [vmem:[%s264 + $0x8] sm:$0xff]
        %v330 = vld [vmem:[%s273] sm:$0xff]
        %v331 = vld [vmem:[%s273 + $0x8] sm:$0xff]
        %v332 = vld [vmem:[%s282] sm:$0xff]
        %v333 = vld [vmem:[%s282 + $0x8] sm:$0xff]
        %v334 = vlog2.pop %v328
        %v335 = vmul.f32 %v334, 0.6931472
        %v336 = vlog2.pop %v329
        %v337 = vmul.f32 %v336, 0.6931472
        %v338 = vmax.f32 %v335, -100.0
        %v339 = vmax.f32 %v337, -100.0
        %v340 = vsub.f32 1.0, %v328
        %v341 = vsub.f32 1.0, %v329
        %v342 = vlog2.pop %v340
        %v343 = vmul.f32 %v342, 0.6931472
        %v344 = vlog2.pop %v341
        %v345 = vmul.f32 %v344, 0.6931472
        %v346 = vmax.f32 %v343, -100.0
        %v347 = vmax.f32 %v345, -100.0
        %v348 = vsub.f32 0.0, %v332
        %v349 = vsub.f32 0.0, %v333
        %v350 = vsub.f32 %v338, %v346
        %v351 = vsub.f32 %v339, %v347
        %v352 = vmul.f32 %v330, %v350
        %v353 = vmul.f32 %v331, %v351
        %v354 = vadd.f32 %v346, %v352
        %v355 = vadd.f32 %v347, %v353
        %v356 = vmul.f32 %v348, %v354
        %v357 = vmul.f32 %v349, %v355
        %vm358 = vcmp.ne.f32.partialorder %v332, 0.0
        %vm359 = vcmp.ne.f32.partialorder %v333, 0.0
        %v360 = vsel %vm358, 1, 0
        %v361 = vsel %vm359, 1, 0
        %v362 = vcvt.s32.f32 %v360
        %v363 = vcvt.s32.f32 %v361
        %v364 = vadd.f32 %v356, %v357
        %v365 = vadd.f32 %v362, %v363
        %v366 = vld [vmem:[%s314] sm:$0xff]
        %v367 = vadd.f32 %v366, %v364
        %368 = vst [vmem:[%s314] sm:$0xff] %v367
        %v369 = vld [vmem:[%s321] sm:$0xff]
        %v370 = vadd.f32 %v369, %v365
        %371 = vst [vmem:[%s321] sm:$0xff] %v370
        %s372 = sand.u32 %s132, 1
        %s373 = scalar_lea.sflag [#allocation4], %s372
        %s374 = sand.u32 %s132, 1
        %s375 = smul.addr %s374, 8
        %s376 = scalar_lea.vmem [#allocation8], %s375
        %s377 = sand.u32 %s158, 1
        %s378 = scalar_lea.sflag [#allocation10], %s377
        %s379 = sand.u32 %s158, 1
        %s380 = smul.addr %s379, 8
        %s381 = scalar_lea.vmem [#allocation9], %s380
        // Predicated region
        $region49: #{tpu_custom_call.1} parent=31 // pred_check
          %p382 = pneg %p142
        $region50: #{tpu_custom_call.1} parent=31 // pred_check_branch
          %384 = sbr.rel (%p382) target = $region52
        $region51: #{tpu_custom_call.1} parent=31 // pred_region
          %s386 = ssub.s32 128, 128
          %387 = vsyncadd %s373, %s386
          %s388 = smul.addr %s32, 128
          %s389 = scalar_lea.hbm %s3, %s388
          %s391 = sshll.u32 %s376, 4
          %s392 = int_to_ptr.vmem [resolvable:$true] %s391
          %394 = dma.vmem_to_hbm [thread:$0]  %s392, 128, %s389, %s373
        $region52: #{tpu_custom_call.1} parent=31 // pred_fallthru
          _
        // Predicated region
        $region53: #{tpu_custom_call.1} parent=31 // pred_check
          %p395 = pneg %p168
        $region54: #{tpu_custom_call.1} parent=31 // pred_check_branch
          %397 = sbr.rel (%p395) target = $region56
        $region55: #{tpu_custom_call.1} parent=31 // pred_region
          %s399 = ssub.s32 128, 128
          %400 = vsyncadd %s378, %s399
          %s401 = smul.addr %s32, 128
          %s402 = scalar_lea.hbm %s4, %s401
          %s404 = sshll.u32 %s381, 4
          %s405 = int_to_ptr.vmem [resolvable:$true] %s404
          %407 = dma.vmem_to_hbm [thread:$0]  %s405, 128, %s402, %s378
        $region56: #{tpu_custom_call.1} parent=31 // pred_fallthru
          _
      $region32: #{tpu_custom_call.1} parent=5 // pred_fallthru
        _
      %p408 = scmp.le.s32.totalorder 2, %s23
      // Predicated region
      $region57: #{tpu_custom_call.1} parent=5 // pred_check
        %p409 = pneg %p408
      $region58: #{tpu_custom_call.1} parent=5 // pred_check_branch
        %411 = sbr.rel (%p409) target = $region60
      $region59: #{tpu_custom_call.1} parent=5 // pred_region
        %s412 = ssub.s32 %s23, 2
        // Predicated region
        $region61: #{tpu_custom_call.1} parent=59 // pred_check
          %p413 = pneg %p148
        $region62: #{tpu_custom_call.1} parent=59 // pred_check_branch
          %415 = sbr.rel (%p413) target = $region64
        $region63: #{tpu_custom_call.1} parent=59 // pred_region
          %s416 = sand.u32 %s133, 1
          %s417 = scalar_lea.sflag [#allocation4], %s416
          %s418 = sand.u32 %s133, 1
          %s419 = smul.addr %s418, 8
          %s420 = scalar_lea.vmem [#allocation8], %s419
          %421 = dma.done %s417, 128
        $region64: #{tpu_custom_call.1} parent=59 // pred_fallthru
          _
        // Predicated region
        $region65: #{tpu_custom_call.1} parent=59 // pred_check
          %p422 = pneg %p174
        $region66: #{tpu_custom_call.1} parent=59 // pred_check_branch
          %424 = sbr.rel (%p422) target = $region68
        $region67: #{tpu_custom_call.1} parent=59 // pred_region
          %s425 = sand.u32 %s159, 1
          %s426 = scalar_lea.sflag [#allocation10], %s425
          %s427 = sand.u32 %s159, 1
          %s428 = smul.addr %s427, 8
          %s429 = scalar_lea.vmem [#allocation9], %s428
          %430 = dma.done %s426, 128
        $region68: #{tpu_custom_call.1} parent=59 // pred_fallthru
          _
      $region60: #{tpu_custom_call.1} parent=5 // pred_fallthru
        _
    $region6: #{tpu_custom_call.1} parent=1 // loop_footer
      %s27 = sadd.s32 1, %s23
    $region7: #{tpu_custom_call.1} parent=1 // loop_footer_branch
      %22 = sbr.rel target = $region3
    $region8: #{tpu_custom_call.1} parent=1 // loop_exit
      _
    %431 = vsyncpa [#allocation3], 1
    %s432 = scalar_lea.sflag [#allocation3], 1
    %433 = vsyncpa %s432, 1
    %434 = vsyncpa [#allocation6], 1
    %s435 = scalar_lea.sflag [#allocation6], 1
    %436 = vsyncpa %s435, 1
    %437 = vsyncpa [#allocation4], 1
    %s438 = scalar_lea.sflag [#allocation4], 1
    %439 = vsyncpa %s438, 1
    %440 = vsyncpa [#allocation10], 1
    %s441 = scalar_lea.sflag [#allocation10], 1
    %442 = vsyncpa %s441, 1

</llo_original>
